<compile_context>
chip_gen: v5e
topology: v5e:2x2
jax: 0.10.0
libtpu: 0.0.40
codegen_flags: <defaults>
</compile_context>

<pallas_src>
import jax
import jax.numpy as jnp
from jax.experimental import pallas as pl
from jax.experimental.pallas import tpu as pltpu

_HIDDEN = 64
_SLOPE = 0.2


def _leaky_relu(x, slope=_SLOPE):
    return jnp.where(x > 0, x, slope * x)


def _round_up(n, m):
    return ((n + m - 1) // m) * m


def discriminator_kernel(x_ref, w1_ref, b1_ref, w2_ref, b2_ref, w3_ref, b3_ref,
                         o_ref):
    # Layer 1: Linear(w_dim, 64) + LeakyReLU(0.2).
    # x arrives f32; cast to bf16 in-kernel (cheap VPU work, hidden under the
    # x DMA) so the MXU runs at full bf16 rate; accumulate in f32.
    xb = x_ref[...].astype(jnp.bfloat16)
    h = jnp.dot(xb, w1_ref[...], preferred_element_type=jnp.float32)
    h = _leaky_relu(h + b1_ref[...])
    # Layer 2: Linear(64, 64) + LeakyReLU(0.2).
    h = jnp.dot(h.astype(jnp.bfloat16), w2_ref[...],
                preferred_element_type=jnp.float32)
    h = _leaky_relu(h + b2_ref[...])
    # Layer 3: Linear(64, 1) + LeakyReLU(0.2).  N=1 -> keep it off the MXU:
    # VPU broadcast-multiply by the (1, 64) weight row + XLU lane reduction.
    r = jnp.sum(h * w3_ref[...], axis=-1, keepdims=True) + b3_ref[...]
    o_ref[...] = _leaky_relu(r).astype(o_ref.dtype)


def discriminator_forward(x, params, *, block_rows=1024):
    """x: (B, w_dim) float32. Returns (B,) float32 (matches x.view(-1))."""
    w1, b1, w2, b2, w3, b3 = params
    B, w_dim = x.shape

    # Batch tile: multiple of 8 sublanes, capped at block_rows; pad ragged B.
    tb = min(block_rows, _round_up(B, 8))
    bp = _round_up(B, tb)
    if bp != B:
        x = jnp.pad(x, ((0, bp - B), (0, 0)))
    grid = (bp // tb,)

    # Resident weights: bf16 halves their (tiny) VMEM footprint / one-time DMA.
    w1b = w1.astype(jnp.bfloat16)
    w2b = w2.astype(jnp.bfloat16)

    flops = 2 * bp * (w_dim * _HIDDEN + _HIDDEN * _HIDDEN + _HIDDEN)
    bytes_accessed = (bp * w_dim * 4 + bp * 4
                      + (w_dim * _HIDDEN + _HIDDEN * _HIDDEN) * 2
                      + (3 * _HIDDEN + 1) * 4)

    out = pl.pallas_call(
        discriminator_kernel,
        out_shape=jax.ShapeDtypeStruct((bp, 1), jnp.float32),
        grid=grid,
        in_specs=[
            pl.BlockSpec((tb, w_dim), lambda i: (i, 0)),         # x tile (streamed)
            pl.BlockSpec((w_dim, _HIDDEN), lambda i: (0, 0)),    # w1 (resident)
            pl.BlockSpec((1, _HIDDEN), lambda i: (0, 0)),        # b1 (resident)
            pl.BlockSpec((_HIDDEN, _HIDDEN), lambda i: (0, 0)),  # w2 (resident)
            pl.BlockSpec((1, _HIDDEN), lambda i: (0, 0)),        # b2 (resident)
            pl.BlockSpec((1, _HIDDEN), lambda i: (0, 0)),        # w3 row (resident)
            pl.BlockSpec((1, 1), lambda i: (0, 0)),              # b3 (resident)
        ],
        out_specs=pl.BlockSpec((tb, 1), lambda i: (i, 0)),
        compiler_params=pltpu.CompilerParams(
            dimension_semantics=("parallel",)),
        cost_estimate=pl.CostEstimate(flops=flops, transcendentals=0,
                                      bytes_accessed=bytes_accessed),
    )(x, w1b, b1, w2b, b2, w3, b3)

    return out[:B, 0]


def init_discriminator_params(key, w_dim):
    """Mirrors initialize_weights(): xavier_normal_ weights, zero biases.
    Weights stored as (in, out); w3 stored as a (1, 64) row."""
    def xavier_normal(k, fan_in, fan_out):
        std = (2.0 / (fan_in + fan_out)) ** 0.5
        return std * jax.random.normal(k, (fan_in, fan_out), dtype=jnp.float32)

    k1, k2, k3 = jax.random.split(key, 3)
    w1 = xavier_normal(k1, w_dim, _HIDDEN)
    b1 = jnp.zeros((1, _HIDDEN), jnp.float32)
    w2 = xavier_normal(k2, _HIDDEN, _HIDDEN)
    b2 = jnp.zeros((1, _HIDDEN), jnp.float32)
    w3 = xavier_normal(k3, _HIDDEN, 1).reshape(1, _HIDDEN)
    b3 = jnp.zeros((1, 1), jnp.float32)
    return (w1, b1, w2, b2, w3, b3)


def _reference_forward(x, params):
    """Pure-JAX reference mirroring the kernel's bf16 rounding of MXU inputs."""
    w1, b1, w2, b2, w3, b3 = params
    f32 = jnp.float32
    xb = x.astype(jnp.bfloat16).astype(f32)
    w1b = w1.astype(jnp.bfloat16).astype(f32)
    w2b = w2.astype(jnp.bfloat16).astype(f32)
    h = _leaky_relu(xb @ w1b + b1)
    h = _leaky_relu(h.astype(jnp.bfloat16).astype(f32) @ w2b + b2)
    r = jnp.sum(h * w3, axis=-1, keepdims=True) + b3
    return _leaky_relu(r).reshape(-1)


if __name__ == "__main__":
    key = jax.random.PRNGKey(0)
    k_param, k_x = jax.random.split(key)

    batch = 8
    w_dim = 32  # class_dim is unused by Discriminator.forward

    params = init_discriminator_params(k_param, w_dim)
    x = jax.random.normal(k_x, (batch, w_dim), dtype=jnp.float32)

    out = discriminator_forward(x, params)
    out = jax.block_until_ready(out)

    ref = _reference_forward(x, params)
    assert out.shape == (batch,)
    assert jnp.allclose(out, ref, atol=1e-4, rtol=1e-4), (
        float(jnp.max(jnp.abs(out - ref))))

    print("KERNEL_OK")
</pallas_src>

<mosaic_0001>
module attributes {stable_mosaic.version = 11 : i64} {
  func.func @discriminator_kernel(%arg0: i32, %arg1: memref<8x32xf32, #tpu.memory_space<vmem>>, %arg2: memref<32x64xbf16, #tpu.memory_space<vmem>>, %arg3: memref<1x64xf32, #tpu.memory_space<vmem>>, %arg4: memref<64x64xbf16, #tpu.memory_space<vmem>>, %arg5: memref<1x64xf32, #tpu.memory_space<vmem>>, %arg6: memref<1x64xf32, #tpu.memory_space<vmem>>, %arg7: memref<1x1xf32, #tpu.memory_space<vmem>>, %arg8: memref<8x1xf32, #tpu.memory_space<vmem>>) attributes {dimension_semantics = [#tpu.dimension_semantics<parallel>], iteration_bounds = array<i64: 1>, scalar_prefetch = 0 : i64, scratch_operands = 0 : i64, tpu.core_type = #tpu.core_type<tc>, window_params = [{transform_indices = @transform_0, window_bounds = array<i64: 8, 32>}, {pipeline_mode = #tpu.pipeline_mode<synchronous>, transform_indices = @transform_1, window_bounds = array<i64: 32, 64>}, {pipeline_mode = #tpu.pipeline_mode<synchronous>, transform_indices = @transform_2, window_bounds = array<i64: 1, 64>}, {pipeline_mode = #tpu.pipeline_mode<synchronous>, transform_indices = @transform_3, window_bounds = array<i64: 64, 64>}, {pipeline_mode = #tpu.pipeline_mode<synchronous>, transform_indices = @transform_4, window_bounds = array<i64: 1, 64>}, {pipeline_mode = #tpu.pipeline_mode<synchronous>, transform_indices = @transform_5, window_bounds = array<i64: 1, 64>}, {pipeline_mode = #tpu.pipeline_mode<synchronous>, transform_indices = @transform_6, window_bounds = array<i64: 1, 1>}, {transform_indices = @transform_7, window_bounds = array<i64: 8, 1>}]} {
    %c0 = arith.constant 0 : index
    %c0_0 = arith.constant 0 : index
    %0 = vector.load %arg1[%c0, %c0_0] : memref<8x32xf32, #tpu.memory_space<vmem>>, vector<8x32xf32>
    %1 = arith.truncf %0 : vector<8x32xf32> to vector<8x32xbf16>
    %c0_1 = arith.constant 0 : index
    %c0_2 = arith.constant 0 : index
    %2 = vector.load %arg2[%c0_1, %c0_2] : memref<32x64xbf16, #tpu.memory_space<vmem>>, vector<32x64xbf16>
    %cst = arith.constant dense<0.000000e+00> : vector<8x64xf32>
    %3 = tpu.matmul %1, %2, %cst {dimension_numbers = #tpu.dot_dimension_numbers<[1], [0], [0], [1], [0, 0, 1, 1], [], []>} : vector<8x32xbf16>, vector<32x64xbf16>, vector<8x64xf32> -> vector<8x64xf32>
    %c0_3 = arith.constant 0 : index
    %c0_4 = arith.constant 0 : index
    %4 = vector.load %arg3[%c0_3, %c0_4] : memref<1x64xf32, #tpu.memory_space<vmem>>, vector<1x64xf32>
    %5 = vector.broadcast %4 : vector<1x64xf32> to vector<8x64xf32>
    %6 = arith.addf %3, %5 : vector<8x64xf32>
    %cst_5 = arith.constant 0.000000e+00 : f32
    %7 = vector.broadcast %cst_5 : f32 to vector<8x64xf32>
    %8 = arith.cmpf ogt, %6, %7 : vector<8x64xf32>
    %cst_6 = arith.constant 2.000000e-01 : f32
    %9 = vector.broadcast %cst_6 : f32 to vector<8x64xf32>
    %10 = arith.mulf %9, %6 : vector<8x64xf32>
    %11 = arith.select %8, %6, %10 : vector<8x64xi1>, vector<8x64xf32>
    %12 = arith.truncf %11 : vector<8x64xf32> to vector<8x64xbf16>
    %c0_7 = arith.constant 0 : index
    %c0_8 = arith.constant 0 : index
    %13 = vector.load %arg4[%c0_7, %c0_8] : memref<64x64xbf16, #tpu.memory_space<vmem>>, vector<64x64xbf16>
    %cst_9 = arith.constant dense<0.000000e+00> : vector<8x64xf32>
    %14 = tpu.matmul %12, %13, %cst_9 {dimension_numbers = #tpu.dot_dimension_numbers<[1], [0], [0], [1], [0, 0, 1, 1], [], []>} : vector<8x64xbf16>, vector<64x64xbf16>, vector<8x64xf32> -> vector<8x64xf32>
    %c0_10 = arith.constant 0 : index
    %c0_11 = arith.constant 0 : index
    %15 = vector.load %arg5[%c0_10, %c0_11] : memref<1x64xf32, #tpu.memory_space<vmem>>, vector<1x64xf32>
    %16 = vector.broadcast %15 : vector<1x64xf32> to vector<8x64xf32>
    %17 = arith.addf %14, %16 : vector<8x64xf32>
    %cst_12 = arith.constant 0.000000e+00 : f32
    %18 = vector.broadcast %cst_12 : f32 to vector<8x64xf32>
    %19 = arith.cmpf ogt, %17, %18 : vector<8x64xf32>
    %cst_13 = arith.constant 2.000000e-01 : f32
    %20 = vector.broadcast %cst_13 : f32 to vector<8x64xf32>
    %21 = arith.mulf %20, %17 : vector<8x64xf32>
    %22 = arith.select %19, %17, %21 : vector<8x64xi1>, vector<8x64xf32>
    %c0_14 = arith.constant 0 : index
    %c0_15 = arith.constant 0 : index
    %23 = vector.load %arg6[%c0_14, %c0_15] : memref<1x64xf32, #tpu.memory_space<vmem>>, vector<1x64xf32>
    %24 = vector.broadcast %23 : vector<1x64xf32> to vector<8x64xf32>
    %25 = arith.mulf %22, %24 : vector<8x64xf32>
    %cst_16 = arith.constant dense<0.000000e+00> : vector<8xf32>
    %26 = vector.multi_reduction <add>, %25, %cst_16 [1] : vector<8x64xf32> to vector<8xf32>
    %27 = vector.shape_cast %26 : vector<8xf32> to vector<8x1xf32>
    %c0_17 = arith.constant 0 : index
    %c0_18 = arith.constant 0 : index
    %28 = vector.load %arg7[%c0_17, %c0_18] : memref<1x1xf32, #tpu.memory_space<vmem>>, vector<1x1xf32>
    %29 = vector.broadcast %28 : vector<1x1xf32> to vector<8x1xf32>
    %30 = arith.addf %27, %29 : vector<8x1xf32>
    %cst_19 = arith.constant 0.000000e+00 : f32
    %31 = vector.broadcast %cst_19 : f32 to vector<8x1xf32>
    %32 = arith.cmpf ogt, %30, %31 : vector<8x1xf32>
    %cst_20 = arith.constant 2.000000e-01 : f32
    %33 = vector.broadcast %cst_20 : f32 to vector<8x1xf32>
    %34 = arith.mulf %33, %30 : vector<8x1xf32>
    %35 = arith.select %32, %30, %34 : vector<8x1xi1>, vector<8x1xf32>
    %c0_21 = arith.constant 0 : index
    %c0_22 = arith.constant 0 : index
    %36 = vector.load %arg8[%c0_21, %c0_22] : memref<8x1xf32, #tpu.memory_space<vmem>>, vector<8x1xf32>
    tpu.vector_store %arg8[%c0_21, %c0_22], %35 {strides = array<i32>} : memref<8x1xf32, #tpu.memory_space<vmem>>, vector<8x1xf32>,
    return
  }
  func.func @transform_0(%arg0: i32) -> (i32, i32) {
    %c0_i32 = arith.constant 0 : i32
    %c0_i32_0 = arith.constant 0 : i32
    return %arg0, %c0_i32 : i32, i32
  }
  func.func @transform_1(%arg0: i32) -> (i32, i32) {
    %c0_i32 = arith.constant 0 : i32
    %c0_i32_0 = arith.constant 0 : i32
    %c0_i32_1 = arith.constant 0 : i32
    return %c0_i32, %c0_i32_0 : i32, i32
  }
  func.func @transform_2(%arg0: i32) -> (i32, i32) {
    %c0_i32 = arith.constant 0 : i32
    %c0_i32_0 = arith.constant 0 : i32
    %c0_i32_1 = arith.constant 0 : i32
    return %c0_i32, %c0_i32_0 : i32, i32
  }
  func.func @transform_3(%arg0: i32) -> (i32, i32) {
    %c0_i32 = arith.constant 0 : i32
    %c0_i32_0 = arith.constant 0 : i32
    %c0_i32_1 = arith.constant 0 : i32
    return %c0_i32, %c0_i32_0 : i32, i32
  }
  func.func @transform_4(%arg0: i32) -> (i32, i32) {
    %c0_i32 = arith.constant 0 : i32
    %c0_i32_0 = arith.constant 0 : i32
    %c0_i32_1 = arith.constant 0 : i32
    return %c0_i32, %c0_i32_0 : i32, i32
  }
  func.func @transform_5(%arg0: i32) -> (i32, i32) {
    %c0_i32 = arith.constant 0 : i32
    %c0_i32_0 = arith.constant 0 : i32
    %c0_i32_1 = arith.constant 0 : i32
    return %c0_i32, %c0_i32_0 : i32, i32
  }
  func.func @transform_6(%arg0: i32) -> (i32, i32) {
    %c0_i32 = arith.constant 0 : i32
    %c0_i32_0 = arith.constant 0 : i32
    %c0_i32_1 = arith.constant 0 : i32
    return %c0_i32, %c0_i32_0 : i32, i32
  }
  func.func @transform_7(%arg0: i32) -> (i32, i32) {
    %c0_i32 = arith.constant 0 : i32
    %c0_i32_0 = arith.constant 0 : i32
    return %arg0, %c0_i32 : i32, i32
  }
}

</mosaic_0001>

<llo_original>
// kernel: tpu_custom_call.1
$region0: #{tpu_custom_call.1}
  #allocation0 [shape = 'u32[]', space=smem, size = 0x4, offset = 0x4, fixed_abs, tag = 'smem constant byte address 0x4 - core index']
  #allocation1 [shape = 'u32[72,128]{1,0:T(1,128)}', space=vmem, size = 0x9000, scoped, tag = 'internal scratch']
  #allocation2 [shape = 'f32[1,1]{1,0:T(1,128)S(1)}', space=vmem, size = 0x200, scoped, tag = 'scoped memory for tpu_custom_call.1']
  %s0 = inlined_call_operand.hbm [shape: f32[8,32], index: 0, kind: input, shape index: {}]
  %s1 = inlined_call_operand.hbm [shape: bf16[32,64], index: 1, kind: input, shape index: {}]
  %s2 = inlined_call_operand.vmem [shape: f32[1,64], index: 2, kind: input, shape index: {}]
  %s3 = inlined_call_operand.hbm [shape: bf16[64,64], index: 3, kind: input, shape index: {}]
  %s4 = inlined_call_operand.vmem [shape: f32[1,64], index: 4, kind: input, shape index: {}]
  %s5 = inlined_call_operand.vmem [shape: f32[1,64], index: 5, kind: input, shape index: {}]
  %s6 = inlined_call_operand.<no memory space> [shape: f32[1,1], index: 6, kind: input, shape index: {}]
  %s7 = inlined_call_operand.vmem [shape: f32[8,1], index: 7, kind: output, shape index: {}]
  %s8 = sld [smem:[#allocation0]]
  $region50: #{tpu_custom_call.1} parent=0
    _
  %s10 = ssub.s32 1, %s8
  %s11 = scalar_select 0, %s10, %s8
  %v12 = vstv %s6
  %13 = vst [vmem:[#allocation2] sm:$0x1] %v12
  $region1: #{tpu_custom_call.1} parent=0
    #allocation3 [shape = 'u8[4096]{0}', space=vmem, size = 0x1000, scoped, tag = 'input window, operand 0, single buffered']
    #allocation4 [shape = 's32[1]{0}', space=sflag, size = 0x4, scoped, tag = 'scoped memory for tpu_custom_call.1']
    #allocation5 [shape = 'u8[8192]{0}', space=vmem, size = 0x2000, scoped, tag = 'input window, operand 1, single buffered']
    #allocation6 [shape = 's32[1]{0}', space=sflag, size = 0x4, scoped, tag = 'scoped memory for tpu_custom_call.1']
    #allocation7 [shape = 'u8[16384]{0}', space=vmem, size = 0x4000, scoped, tag = 'input window, operand 3, single buffered']
    %14 = vsyncpa [#allocation4], 0
    %15 = vsyncpa [#allocation6], 0
    // Predicated region
    $region2: #{tpu_custom_call.1} parent=1 // pred_check
      _
    $region3: #{tpu_custom_call.1} parent=1 // pred_check_branch
      %17 = sbr.rel (0) target = $region5
    $region4: #{tpu_custom_call.1} parent=1 // pred_region
      %19 = vsyncadd [#allocation4], 0
      %s21 = sshll.u32 %s0, 4
      %s22 = int_to_ptr.hbm [resolvable:$true] %s21
      %s23 = sshll.u32 [#allocation3], 4
      %s24 = int_to_ptr.vmem [resolvable:$true] %s23
      %26 = dma.hbm_to_vmem [thread:$0]  %s22, 128, %s24, [#allocation4]
    $region5: #{tpu_custom_call.1} parent=1 // pred_fallthru
      _
    // Predicated region
    $region6: #{tpu_custom_call.1} parent=1 // pred_check
      _
    $region7: #{tpu_custom_call.1} parent=1 // pred_check_branch
      %28 = sbr.rel (0) target = $region9
    $region8: #{tpu_custom_call.1} parent=1 // pred_region
      %30 = vsyncadd [#allocation6], 0
      %s31 = sshll.u32 %s1, 4
      %s32 = int_to_ptr.hbm [resolvable:$true] %s31
      %s33 = sshll.u32 [#allocation5], 4
      %s34 = int_to_ptr.vmem [resolvable:$true] %s33
      %39 = dma.hbm_to_vmem [thread:$0]  %s32, 256, %s34, [#allocation6], 64, 64, 4
    $region9: #{tpu_custom_call.1} parent=1 // pred_fallthru
      _
    // Predicated region
    $region10: #{tpu_custom_call.1} parent=1 // pred_check
      _
    $region11: #{tpu_custom_call.1} parent=1 // pred_check_branch
      %41 = sbr.rel (0) target = $region13
    $region12: #{tpu_custom_call.1} parent=1 // pred_region
      _
    $region13: #{tpu_custom_call.1} parent=1 // pred_fallthru
      _
    // Predicated region
    $region14: #{tpu_custom_call.1} parent=1 // pred_check
      _
    $region15: #{tpu_custom_call.1} parent=1 // pred_check_branch
      %43 = sbr.rel (0) target = $region17
    $region16: #{tpu_custom_call.1} parent=1 // pred_region
      %45 = vsyncadd [#allocation6], 0
      %s46 = sshll.u32 %s3, 4
      %s47 = int_to_ptr.hbm [resolvable:$true] %s46
      %s48 = sshll.u32 [#allocation7], 4
      %s49 = int_to_ptr.vmem [resolvable:$true] %s48
      %54 = dma.hbm_to_vmem [thread:$0]  %s47, 512, %s49, [#allocation6], 64, 64, 4
    $region17: #{tpu_custom_call.1} parent=1 // pred_fallthru
      _
    // Predicated region
    $region18: #{tpu_custom_call.1} parent=1 // pred_check
      _
    $region19: #{tpu_custom_call.1} parent=1 // pred_check_branch
      %56 = sbr.rel (0) target = $region21
    $region20: #{tpu_custom_call.1} parent=1 // pred_region
      _
    $region21: #{tpu_custom_call.1} parent=1 // pred_fallthru
      _
    // Predicated region
    $region22: #{tpu_custom_call.1} parent=1 // pred_check
      _
    $region23: #{tpu_custom_call.1} parent=1 // pred_check_branch
      %58 = sbr.rel (0) target = $region25
    $region24: #{tpu_custom_call.1} parent=1 // pred_region
      _
    $region25: #{tpu_custom_call.1} parent=1 // pred_fallthru
      _
    // Predicated region
    $region26: #{tpu_custom_call.1} parent=1 // pred_check
      _
    $region27: #{tpu_custom_call.1} parent=1 // pred_check_branch
      %60 = sbr.rel (0) target = $region29
    $region28: #{tpu_custom_call.1} parent=1 // pred_region
      _
    $region29: #{tpu_custom_call.1} parent=1 // pred_fallthru
      _
    // Predicated region
    $region30: #{tpu_custom_call.1} parent=1 // pred_check
      _
    $region31: #{tpu_custom_call.1} parent=1 // pred_check_branch
      %62 = sbr.rel (0) target = $region33
    $region32: #{tpu_custom_call.1} parent=1 // pred_region
      %64 = dma.done [#allocation4], 128
    $region33: #{tpu_custom_call.1} parent=1 // pred_fallthru
      _
    // Predicated region
    $region34: #{tpu_custom_call.1} parent=1 // pred_check
      _
    $region35: #{tpu_custom_call.1} parent=1 // pred_check_branch
      %66 = sbr.rel (0) target = $region37
    $region36: #{tpu_custom_call.1} parent=1 // pred_region
      %68 = dma.done [#allocation6], 256
    $region37: #{tpu_custom_call.1} parent=1 // pred_fallthru
      _
    // Predicated region
    $region38: #{tpu_custom_call.1} parent=1 // pred_check
      _
    $region39: #{tpu_custom_call.1} parent=1 // pred_check_branch
      %70 = sbr.rel (0) target = $region41
    $region40: #{tpu_custom_call.1} parent=1 // pred_region
      %72 = dma.done [#allocation6], 512
    $region41: #{tpu_custom_call.1} parent=1 // pred_fallthru
      _
    %v74 = vld [vmem:[#allocation3] sm:$0xff]
    %v75 = vpack.c.bf16 %v74, %v74
    %v76 = vld [vmem:[#allocation5] sm:$0xf]
    %v77 = vld [vmem:[#allocation5 + $0x4] sm:$0xf]
    %v78 = vld [vmem:[#allocation5 + $0x8] sm:$0xf]
    %v79 = vld [vmem:[#allocation5 + $0xc] sm:$0xf]
    %v80 = vld [vmem:[%s2] sm:$0x1]
    %v82 = vperm.slane %v80, 0
    %v88 = vunpack.c.l.b16 %v76
    %v89 = vunpack.c.l.b16 %v77
    %v90 = vunpack.c.l.b16 %v78
    %v91 = vunpack.c.l.b16 %v79
    %v92 = vpack.c.b16 %v89, %v88
    %v93 = vpack.c.b16 %v91, %v90
    %vm96 = vcmask 261120
    %v98 = vsel %vm96, %v75, 0
    %100 = vmatpush.bf16.msra.mxu0 0
    %101 = vmatpush.bf16.msra.mxu0 0
    %102 = vmatpush.bf16.msra.mxu0 0
    %103 = vmatpush.bf16.msra.mxu0 0
    %104 = vmatpush.bf16.msra.mxu0 0
    %105 = vmatpush.bf16.msra.mxu0 0
    %106 = vmatpush.bf16.msra.mxu0 %v93
    %107 = vmatpush.bf16.msra.mxu0 %v92
    %108 = vmatmul.bf16.gmra.mxu0 %v98
    %v109 = vpop.f32.mrf.mxu0
    %v110 = vadd.f32 %v82, %v109
    %v111 = vpop.f32.mrf.mxu0
    %112 = vdwg.mxu0
    %vm113 = vcmp.gt.f32.partialorder %v110, 0.0
    %v114 = vmul.f32 %v110, 0.2
    %v115 = vsel %vm113, %v110, %v114
    %v116 = vpack.c.bf16 %v115, %v115
    %v117 = vld [vmem:[#allocation7] sm:$0xf]
    %v118 = vld [vmem:[#allocation7 + $0x4] sm:$0xf]
    %v119 = vld [vmem:[#allocation7 + $0x8] sm:$0xf]
    %v120 = vld [vmem:[#allocation7 + $0xc] sm:$0xf]
    %v121 = vld [vmem:[#allocation7 + $0x10] sm:$0xf]
    %v122 = vld [vmem:[#allocation7 + $0x14] sm:$0xf]
    %v123 = vld [vmem:[#allocation7 + $0x18] sm:$0xf]
    %v124 = vld [vmem:[#allocation7 + $0x1c] sm:$0xf]
    %v125 = vld [vmem:[%s4] sm:$0x1]
    %v127 = vperm.slane %v125, 0
    %v137 = vunpack.c.l.b16 %v117
    %v138 = vunpack.c.l.b16 %v118
    %v139 = vunpack.c.l.b16 %v119
    %v140 = vunpack.c.l.b16 %v120
    %v141 = vunpack.c.l.b16 %v121
    %v142 = vunpack.c.l.b16 %v122
    %v143 = vunpack.c.l.b16 %v123
    %v144 = vunpack.c.l.b16 %v124
    %v145 = vpack.c.b16 %v138, %v137
    %v146 = vpack.c.b16 %v140, %v139
    %v147 = vpack.c.b16 %v142, %v141
    %v148 = vpack.c.b16 %v144, %v143
    %vm153 = vcmask 523264
    %v155 = vsel %vm153, %v116, 0
    %157 = vmatpush.bf16.msra.mxu0 0
    %158 = vmatpush.bf16.msra.mxu0 0
    %159 = vmatpush.bf16.msra.mxu0 0
    %160 = vmatpush.bf16.msra.mxu0 0
    %161 = vmatpush.bf16.msra.mxu0 %v148
    %162 = vmatpush.bf16.msra.mxu0 %v147
    %163 = vmatpush.bf16.msra.mxu0 %v146
    %164 = vmatpush.bf16.msra.mxu0 %v145
    %165 = vmatmul.bf16.gmra.mxu0 %v155
    %v166 = vpop.f32.mrf.mxu0
    %v167 = vadd.f32 %v127, %v166
    %v168 = vpop.f32.mrf.mxu0
    %169 = vdwg.mxu0
    %vm170 = vcmp.gt.f32.partialorder %v167, 0.0
    %v171 = vmul.f32 %v167, 0.2
    %v172 = vsel %vm170, %v167, %v171
    %v173 = vld [vmem:[%s5] sm:$0x1]
    %v175 = vperm.slane %v173, 0
    %v177 = vmul.f32 %v172, %v175
    %v178 = vsel %vm153, %v177, 0.0
    %179 = vadd.xlane.f32.xlu0 %v178
    %v180 = vpop.xlane.xlu0 %179
    %v181 = vld [vmem:[#allocation2] sm:$0x1]
    %v183 = vperm.slane %v181, 0
    %v185 = vadd.f32 %v180, %v183
    %vm186 = vcmp.gt.f32.partialorder %v185, 0.0
    %v187 = vmul.f32 %v185, 0.2
    %v188 = vsel %vm186, %v185, %v187
    %vm189 = vcmask 7168
    %190 = vst.msk [vmem:[%s7] sm:$0xff] %vm189, %v188
    // Predicated region
    $region42: #{tpu_custom_call.1} parent=1 // pred_check
      _
    $region43: #{tpu_custom_call.1} parent=1 // pred_check_branch
      %192 = sbr.rel (0) target = $region45
    $region44: #{tpu_custom_call.1} parent=1 // pred_region
      _
    $region45: #{tpu_custom_call.1} parent=1 // pred_fallthru
      _
    // Predicated region
    $region46: #{tpu_custom_call.1} parent=1 // pred_check
      _
    $region47: #{tpu_custom_call.1} parent=1 // pred_check_branch
      %194 = sbr.rel (0) target = $region49
    $region48: #{tpu_custom_call.1} parent=1 // pred_region
      _
    $region49: #{tpu_custom_call.1} parent=1 // pred_fallthru
      _
    %195 = vsyncpa [#allocation4], 1
    %196 = vsyncpa [#allocation6], 1

</llo_original>
